<compile_context>
chip_gen: v6e
topology: v6e:2x2x1
jax: 0.10.0
libtpu: 0.0.40
codegen_flags: <defaults>
</compile_context>

<pallas_src>
from functools import partial

import jax
import jax.numpy as jnp
from jax import lax
from jax.experimental import pallas as pl
from jax.experimental.pallas import tpu as pltpu

# Fixed "parameter" of the module (Laplacian stencil); coefficients are
# inlined in the kernel below.
LAPLACIAN_KERNEL = jnp.array([[0., -1., 0.],
                              [-1., 4., -1.],
                              [0., -1., 0.]], dtype=jnp.float32)


def _lap_sq_partial_kernel(p_ref, t_ref, mu_ref, md_ref, ml_ref, mr_ref,
                           out_ref, *, W, HW, N, TB):
    """One grid step: TB images (flattened to H*W lanes) -> lane-dense partial.

    p_ref / t_ref : (TB, H*W) input blocks in VMEM, native dtype
    m*_ref        : (1, H*W) f32 0/1 boundary masks (resident across the grid)
    out_ref       : (1, 1, H*W) f32 partial sums (per flattened pixel index)
    """
    # Linearity of the stencil: filter the difference once.
    d = p_ref[...].astype(jnp.float32) - t_ref[...].astype(jnp.float32)

    # 5-point Laplacian with zero padding.  roll(x, s)[f] == x[(f - s) mod HW],
    # so roll(d, W) fetches the "up" neighbour x[f - W]; the per-lane mask
    # zeroes wrap-around lanes with a single broadcast multiply (no iota, no
    # integer mod, no select in the hot loop).
    up    = mu_ref[...] * pltpu.roll(d, W,      axis=1)   # x[f - W]
    down  = md_ref[...] * pltpu.roll(d, HW - W, axis=1)   # x[f + W]
    left  = ml_ref[...] * pltpu.roll(d, 1,      axis=1)   # x[f - 1]
    right = mr_ref[...] * pltpu.roll(d, HW - 1, axis=1)   # x[f + 1]

    lap = 4.0 * d - up - down - left - right
    sq = lap * lap

    if N % TB != 0:
        # Ragged batch tail: mask out-of-range sublanes of the last block.
        # (Select, not multiply, so garbage NaN/inf rows cannot propagate.)
        row = pl.program_id(0) * TB + lax.broadcasted_iota(jnp.int32, (TB, 1), 0)
        sq = jnp.where(row < N, sq, 0.0)

    # Reduce over the batch (sublane) axis only; the store stays lane-dense.
    out_ref[0] = jnp.sum(sq, axis=0, keepdims=True)


def _vmem_limit_bytes():
    """Generation-aware VMEM limit: ~3/4 of physical VMEM, capped at 100 MiB.

    v5e/v6e (128 MiB physical) -> 96 MiB; v7x (64 MiB per TC) -> 48 MiB.
    Falls back to the conservative v7x number if the query is unavailable.
    """
    cap = 0
    try:
        cap = int(getattr(pltpu.get_tpu_info(), "vmem_capacity_bytes", 0))
    except Exception:
        cap = 0
    if cap <= 0:
        cap = 64 * 1024 * 1024
    return min((cap * 3) // 4, 100 * 1024 * 1024)


def _choose_batch_block(N, HW, itemsize, block_budget_bytes, target_steps=8):
    """Batch block TB: biggest multiple of 8 fitting the VMEM budget, capped so
    the grid keeps ~target_steps steps (DMA pipelining + v7x dual-TC sharding).
    """
    lanes = pl.cdiv(HW, 128) * 128
    # Per-batch-row VMEM footprint of one grid step:
    #   2 inputs x 2 pipeline buffers at native dtype
    # + ~5 full-block f32 temporaries (diff, rolled neighbours, lap) that the
    #   body materializes (counts correctly for bf16 inputs too).
    row_bytes = lanes * (2 * 2 * itemsize + 5 * 4)
    tb_vmem = max(1, block_budget_bytes // row_bytes)
    # Keep >= ~target_steps grid steps, but never shrink below 8 sublanes for
    # that reason alone (tiny blocks hit per-step overhead / masked loads).
    tb_steps = max(8, pl.cdiv(N, target_steps))
    tb = min(N, tb_vmem, tb_steps)
    if tb >= 8:
        tb = (tb // 8) * 8           # multiple-of-8 sublanes
    elif tb != N:
        tb = min(N, 8)               # keep sublane dim full-extent or 8-aligned
    return tb


def laplacian_pyramid_loss(pred, target):
    """MSE( conv2d(pred, lap, pad=1), conv2d(target, lap, pad=1) )."""
    N, C, H, W = pred.shape
    assert pred.shape == target.shape
    assert C == 1, "Laplacian kernel is (1,1,3,3): single-channel inputs only"
    HW = H * W

    # Free, contiguous reshapes (no pad, no cast, no diff pass in the wrapper).
    p = pred.reshape(N, HW)
    t = target.reshape(N, HW)

    # Per-lane boundary masks for the zero-padded stencil, built once by XLA
    # (tiny) and kept VMEM-resident via a constant index_map.
    f = jnp.arange(HW, dtype=jnp.int32)
    col = f % W
    m_up = (f >= W).astype(jnp.float32).reshape(1, HW)
    m_dn = (f < HW - W).astype(jnp.float32).reshape(1, HW)
    m_lf = (col >= 1).astype(jnp.float32).reshape(1, HW)
    m_rt = (col <= W - 2).astype(jnp.float32).reshape(1, HW)

    vmem_limit = _vmem_limit_bytes()
    itemsize = max(pred.dtype.itemsize, target.dtype.itemsize)
    TB = _choose_batch_block(N, HW, itemsize, (vmem_limit * 4) // 5)
    G = pl.cdiv(N, TB)

    kernel = partial(_lap_sq_partial_kernel, W=W, HW=HW, N=N, TB=TB)

    partials = pl.pallas_call(
        kernel,
        out_shape=jax.ShapeDtypeStruct((G, 1, HW), jnp.float32),
        grid=(G,),
        in_specs=[
            pl.BlockSpec((TB, HW), lambda i: (i, 0)),
            pl.BlockSpec((TB, HW), lambda i: (i, 0)),
            pl.BlockSpec((1, HW), lambda i: (0, 0)),   # masks: constant block,
            pl.BlockSpec((1, HW), lambda i: (0, 0)),   # DMA'd once, resident
            pl.BlockSpec((1, HW), lambda i: (0, 0)),
            pl.BlockSpec((1, HW), lambda i: (0, 0)),
        ],
        out_specs=pl.BlockSpec((1, 1, HW), lambda i: (i, 0, 0)),
        compiler_params=pltpu.CompilerParams(
            dimension_semantics=("parallel",),   # stateless per-step outputs:
            vmem_limit_bytes=vmem_limit,         # grid can shard across TCs.
        ),
    )(p, t, m_up, m_dn, m_lf, m_rt)

    # Final tree reduction + mean in XLA (f32 partials).
    return jnp.sum(partials) / jnp.float32(N * C * H * W)


def _reference_loss(pred, target):
    """Pure-JAX reference using lax.conv (NCHW, pad=1), for verification."""
    w = LAPLACIAN_KERNEL.reshape(1, 1, 3, 3)
    conv = lambda x: lax.conv_general_dilated(
        x.astype(jnp.float32), w, window_strides=(1, 1),
        padding=((1, 1), (1, 1)), dimension_numbers=("NCHW", "OIHW", "NCHW"))
    d = conv(pred) - conv(target)
    return jnp.mean(d * d)


if __name__ == "__main__":
    key = jax.random.PRNGKey(0)
    k1, k2, k3, k4 = jax.random.split(key, 4)

    # Case 1: friendly shapes — multi-step grid (TB=8, G=4), power-of-two W.
    N, C, H, W = 32, 1, 16, 16
    pred = jax.random.normal(k1, (N, C, H, W), dtype=jnp.float32)
    target = jax.random.normal(k2, (N, C, H, W), dtype=jnp.float32)
    loss = jax.block_until_ready(laplacian_pyramid_loss(pred, target))
    ref = jax.block_until_ready(_reference_loss(pred, target))
    assert jnp.allclose(loss, ref, rtol=1e-5, atol=1e-5), (loss, ref)

    # Case 2: awkward shapes — non-power-of-two W, ragged batch tail (N % TB != 0).
    N2, H2, W2 = 20, 16, 24
    pred2 = jax.random.normal(k3, (N2, 1, H2, W2), dtype=jnp.float32)
    target2 = jax.random.normal(k4, (N2, 1, H2, W2), dtype=jnp.float32)
    loss2 = jax.block_until_ready(laplacian_pyramid_loss(pred2, target2))
    ref2 = jax.block_until_ready(_reference_loss(pred2, target2))
    assert jnp.allclose(loss2, ref2, rtol=1e-5, atol=1e-5), (loss2, ref2)

    print("KERNEL_OK")
</pallas_src>

<mosaic_0001>
module attributes {stable_mosaic.version = 11 : i64} {
  func.func @_lap_sq_partial_kernel(%arg0: i32, %arg1: memref<8x256xf32, #tpu.memory_space<vmem>>, %arg2: memref<8x256xf32, #tpu.memory_space<vmem>>, %arg3: memref<1x256xf32, #tpu.memory_space<vmem>>, %arg4: memref<1x256xf32, #tpu.memory_space<vmem>>, %arg5: memref<1x256xf32, #tpu.memory_space<vmem>>, %arg6: memref<1x256xf32, #tpu.memory_space<vmem>>, %arg7: memref<1x1x256xf32, #tpu.memory_space<vmem>>) attributes {dimension_semantics = [#tpu.dimension_semantics<parallel>], iteration_bounds = array<i64: 4>, scalar_prefetch = 0 : i64, scratch_operands = 0 : i64, tpu.core_type = #tpu.core_type<tc>, window_params = [{transform_indices = @transform_0, window_bounds = array<i64: 8, 256>}, {transform_indices = @transform_1, window_bounds = array<i64: 8, 256>}, {pipeline_mode = #tpu.pipeline_mode<synchronous>, transform_indices = @transform_2, window_bounds = array<i64: 1, 256>}, {pipeline_mode = #tpu.pipeline_mode<synchronous>, transform_indices = @transform_3, window_bounds = array<i64: 1, 256>}, {pipeline_mode = #tpu.pipeline_mode<synchronous>, transform_indices = @transform_4, window_bounds = array<i64: 1, 256>}, {pipeline_mode = #tpu.pipeline_mode<synchronous>, transform_indices = @transform_5, window_bounds = array<i64: 1, 256>}, {transform_indices = @transform_6, window_bounds = array<i64: 1, 1, 256>}]} {
    %c0 = arith.constant 0 : index
    %c0_0 = arith.constant 0 : index
    %0 = vector.load %arg1[%c0, %c0_0] : memref<8x256xf32, #tpu.memory_space<vmem>>, vector<8x256xf32>
    %c0_1 = arith.constant 0 : index
    %c0_2 = arith.constant 0 : index
    %1 = vector.load %arg2[%c0_1, %c0_2] : memref<8x256xf32, #tpu.memory_space<vmem>>, vector<8x256xf32>
    %2 = arith.subf %0, %1 : vector<8x256xf32>
    %c0_3 = arith.constant 0 : index
    %c0_4 = arith.constant 0 : index
    %3 = vector.load %arg3[%c0_3, %c0_4] : memref<1x256xf32, #tpu.memory_space<vmem>>, vector<1x256xf32>
    %c16_i32 = arith.constant 16 : i32
    %4 = tpu.dynamic_rotate %2 by %c16_i32 dim 1 : vector<8x256xf32>, i32 -> vector<8x256xf32>
    %5 = vector.broadcast %3 : vector<1x256xf32> to vector<8x256xf32>
    %6 = arith.mulf %5, %4 : vector<8x256xf32>
    %c0_5 = arith.constant 0 : index
    %c0_6 = arith.constant 0 : index
    %7 = vector.load %arg4[%c0_5, %c0_6] : memref<1x256xf32, #tpu.memory_space<vmem>>, vector<1x256xf32>
    %c240_i32 = arith.constant 240 : i32
    %8 = tpu.dynamic_rotate %2 by %c240_i32 dim 1 : vector<8x256xf32>, i32 -> vector<8x256xf32>
    %9 = vector.broadcast %7 : vector<1x256xf32> to vector<8x256xf32>
    %10 = arith.mulf %9, %8 : vector<8x256xf32>
    %c0_7 = arith.constant 0 : index
    %c0_8 = arith.constant 0 : index
    %11 = vector.load %arg5[%c0_7, %c0_8] : memref<1x256xf32, #tpu.memory_space<vmem>>, vector<1x256xf32>
    %c1_i32 = arith.constant 1 : i32
    %12 = tpu.dynamic_rotate %2 by %c1_i32 dim 1 : vector<8x256xf32>, i32 -> vector<8x256xf32>
    %13 = vector.broadcast %11 : vector<1x256xf32> to vector<8x256xf32>
    %14 = arith.mulf %13, %12 : vector<8x256xf32>
    %c0_9 = arith.constant 0 : index
    %c0_10 = arith.constant 0 : index
    %15 = vector.load %arg6[%c0_9, %c0_10] : memref<1x256xf32, #tpu.memory_space<vmem>>, vector<1x256xf32>
    %c255_i32 = arith.constant 255 : i32
    %16 = tpu.dynamic_rotate %2 by %c255_i32 dim 1 : vector<8x256xf32>, i32 -> vector<8x256xf32>
    %17 = vector.broadcast %15 : vector<1x256xf32> to vector<8x256xf32>
    %18 = arith.mulf %17, %16 : vector<8x256xf32>
    %cst = arith.constant 4.000000e+00 : f32
    %19 = vector.broadcast %cst : f32 to vector<8x256xf32>
    %20 = arith.mulf %19, %2 : vector<8x256xf32>
    %21 = arith.subf %20, %6 : vector<8x256xf32>
    %22 = arith.subf %21, %10 : vector<8x256xf32>
    %23 = arith.subf %22, %14 : vector<8x256xf32>
    %24 = arith.subf %23, %18 : vector<8x256xf32>
    %25 = arith.mulf %24, %24 : vector<8x256xf32>
    %cst_11 = arith.constant dense<0.000000e+00> : vector<256xf32>
    %26 = vector.multi_reduction <add>, %25, %cst_11 [0] : vector<8x256xf32> to vector<256xf32>
    %27 = vector.shape_cast %26 : vector<256xf32> to vector<1x256xf32>
    %c0_12 = arith.constant 0 : index
    %c0_13 = arith.constant 0 : index
    %c0_14 = arith.constant 0 : index
    %28 = vector.load %arg7[%c0_12, %c0_13, %c0_14] : memref<1x1x256xf32, #tpu.memory_space<vmem>>, vector<1x1x256xf32>
    %29 = vector.shape_cast %28 : vector<1x1x256xf32> to vector<1x256xf32>
    %30 = vector.shape_cast %27 : vector<1x256xf32> to vector<1x1x256xf32>
    tpu.vector_store %arg7[%c0_12, %c0_13, %c0_14], %30 {strides = array<i32>} : memref<1x1x256xf32, #tpu.memory_space<vmem>>, vector<1x1x256xf32>,
    return
  }
  func.func @transform_0(%arg0: i32) -> (i32, i32) {
    %c0_i32 = arith.constant 0 : i32
    %c0_i32_0 = arith.constant 0 : i32
    return %arg0, %c0_i32 : i32, i32
  }
  func.func @transform_1(%arg0: i32) -> (i32, i32) {
    %c0_i32 = arith.constant 0 : i32
    %c0_i32_0 = arith.constant 0 : i32
    return %arg0, %c0_i32 : i32, i32
  }
  func.func @transform_2(%arg0: i32) -> (i32, i32) {
    %c0_i32 = arith.constant 0 : i32
    %c0_i32_0 = arith.constant 0 : i32
    %c0_i32_1 = arith.constant 0 : i32
    return %c0_i32, %c0_i32_0 : i32, i32
  }
  func.func @transform_3(%arg0: i32) -> (i32, i32) {
    %c0_i32 = arith.constant 0 : i32
    %c0_i32_0 = arith.constant 0 : i32
    %c0_i32_1 = arith.constant 0 : i32
    return %c0_i32, %c0_i32_0 : i32, i32
  }
  func.func @transform_4(%arg0: i32) -> (i32, i32) {
    %c0_i32 = arith.constant 0 : i32
    %c0_i32_0 = arith.constant 0 : i32
    %c0_i32_1 = arith.constant 0 : i32
    return %c0_i32, %c0_i32_0 : i32, i32
  }
  func.func @transform_5(%arg0: i32) -> (i32, i32) {
    %c0_i32 = arith.constant 0 : i32
    %c0_i32_0 = arith.constant 0 : i32
    %c0_i32_1 = arith.constant 0 : i32
    return %c0_i32, %c0_i32_0 : i32, i32
  }
  func.func @transform_6(%arg0: i32) -> (i32, i32, i32) {
    %c0_i32 = arith.constant 0 : i32
    %c0_i32_0 = arith.constant 0 : i32
    %c0_i32_1 = arith.constant 0 : i32
    return %arg0, %c0_i32, %c0_i32_0 : i32, i32, i32
  }
}

</mosaic_0001>

<llo_original>
// kernel: tpu_custom_call.1
$region0: #{tpu_custom_call.1}
  #allocation0 [shape = 'u32[]', space=smem, size = 0x4, offset = 0x4, fixed_abs, tag = 'smem constant byte address 0x4 - core index']
  #allocation1 [shape = 'u32[144,128]{1,0:T(1,128)}', space=vmem, size = 0x12000, scoped, tag = 'internal scratch']
  %s0 = inlined_call_operand.hbm [shape: f32[32,256], index: 0, kind: input, shape index: {}]
  %s1 = inlined_call_operand.hbm [shape: f32[32,256], index: 1, kind: input, shape index: {}]
  %s2 = inlined_call_operand.vmem [shape: f32[1,256], index: 2, kind: input, shape index: {}]
  %s3 = inlined_call_operand.vmem [shape: f32[1,256], index: 3, kind: input, shape index: {}]
  %s4 = inlined_call_operand.vmem [shape: f32[1,256], index: 4, kind: input, shape index: {}]
  %s5 = inlined_call_operand.vmem [shape: f32[1,256], index: 5, kind: input, shape index: {}]
  %s6 = inlined_call_operand.hbm [shape: f32[4,1,256], index: 6, kind: output, shape index: {}]
  %s7 = sld [smem:[#allocation0]]
  $region65: #{tpu_custom_call.1} parent=0
    _
  %s9 = ssub.s32 1, %s7
  %s10 = scalar_select 0, %s9, %s7
  $region1: #{tpu_custom_call.1} parent=0
    #allocation2 [shape = 'u8[16384]{0}', space=vmem, size = 0x4000, scoped, tag = 'input window, operand 0']
    #allocation3 [shape = 's32[2]{0}', space=sflag, size = 0x8, scoped, tag = 'scoped memory for tpu_custom_call.1']
    #allocation4 [shape = 's32[2]{0}', space=sflag, size = 0x8, scoped, tag = 'scoped memory for tpu_custom_call.1']
    #allocation5 [shape = 'u8[16384]{0}', space=vmem, size = 0x4000, scoped, tag = 'input window, operand 1']
    #allocation6 [shape = 's32[2]{0}', space=sflag, size = 0x8, scoped, tag = 'scoped memory for tpu_custom_call.1']
    #allocation7 [shape = 'u8[2048]{0}', space=vmem, size = 0x800, scoped, tag = 'output window, operand 0']
    %11 = vsyncpa [#allocation3], 0
    %s12 = scalar_lea.sflag [#allocation3], 1
    %13 = vsyncpa %s12, 0
    %14 = vsyncpa [#allocation6], 0
    %s15 = scalar_lea.sflag [#allocation6], 1
    %16 = vsyncpa %s15, 0
    %17 = vsyncpa [#allocation4], 0
    %s18 = scalar_lea.sflag [#allocation4], 1
    %19 = vsyncpa %s18, 0
    loop: start=0, step=1, limit=6
    $region2: #{tpu_custom_call.1} parent=1 // loop_pre_header
      _
    $region3: #{tpu_custom_call.1} parent=1 // loop_header
      %s21 = sphi 0, %s25
      %p22 = scmp.ge.s32.totalorder %s21, 6
      %s31 = sphi 0, %s33
      %s34 = sphi 0, %s31
      %s35 = sphi 0, %s34
      %s51 = sphi 0, %s35
      %s57 = sphi 0, %s59
      %s60 = sphi 0, %s57
      %s61 = sphi 0, %s60
      %s77 = sphi 0, %s61
      %s81 = sphi 0, %s81
      %s83 = sphi 0, %s81
      %s84 = sphi 0, %s83
      %s98 = sphi 0, %s84
      %s102 = sphi 0, %s102
      %s104 = sphi 0, %s102
      %s105 = sphi 0, %s104
      %s119 = sphi 0, %s105
      %s123 = sphi 0, %s123
      %s125 = sphi 0, %s123
      %s126 = sphi 0, %s125
      %s140 = sphi 0, %s126
      %s144 = sphi 0, %s144
      %s146 = sphi 0, %s144
      %s147 = sphi 0, %s146
      %s161 = sphi 0, %s147
      %s167 = sphi 0, %s169
      %s170 = sphi 0, %s167
      %s171 = sphi 0, %s170
      %s187 = sphi 0, %s171
    $region4: #{tpu_custom_call.1} parent=1 // loop_header_branch
      %24 = sbr.rel (%p22) target = $region8
    $region5: #{tpu_custom_call.1} parent=1 // loop_body
      %s26 = ssub.s32 %s21, 1
      %s27 = ssub.s32 %s21, 2
      %s28 = sadd.s32 %s21, 1
      %s29 = ssub.s32 %s21, %s28
      %p30 = scmp.eq.s32.totalorder %s29, 0
      %s32 = sadd.s32 %s31, 1
      %s33 = scalar_select %p30, %s31, %s32
      %p36 = pneg %p30
      %p37 = scmp.eq.s32.totalorder %s21, 3
      %p38 = por %p36, %p37
      %p39 = scmp.ne.s32.totalorder %s31, %s34
      %p40 = scmp.eq.s32.totalorder %s21, 0
      %p41 = por %p39, %p40
      %p42 = scmp.ne.s32.totalorder %s31, %s34
      %p43 = scmp.eq.s32.totalorder %s26, 3
      %p44 = por %p42, %p43
      %p45 = scmp.ne.s32.totalorder %s34, %s35
      %p46 = scmp.eq.s32.totalorder %s26, 0
      %p47 = por %p45, %p46
      %p48 = scmp.ne.s32.totalorder %s34, %s35
      %p49 = scmp.eq.s32.totalorder %s27, 3
      %p50 = por %p48, %p49
      %p52 = scmp.ne.s32.totalorder %s35, %s51
      %p53 = scmp.eq.s32.totalorder %s27, 0
      %p54 = por %p52, %p53
      %s55 = ssub.s32 %s21, %s28
      %p56 = scmp.eq.s32.totalorder %s55, 0
      %s58 = sadd.s32 %s57, 1
      %s59 = scalar_select %p56, %s57, %s58
      %p62 = pneg %p56
      %p63 = scmp.eq.s32.totalorder %s21, 3
      %p64 = por %p62, %p63
      %p65 = scmp.ne.s32.totalorder %s57, %s60
      %p66 = scmp.eq.s32.totalorder %s21, 0
      %p67 = por %p65, %p66
      %p68 = scmp.ne.s32.totalorder %s57, %s60
      %p69 = scmp.eq.s32.totalorder %s26, 3
      %p70 = por %p68, %p69
      %p71 = scmp.ne.s32.totalorder %s60, %s61
      %p72 = scmp.eq.s32.totalorder %s26, 0
      %p73 = por %p71, %p72
      %p74 = scmp.ne.s32.totalorder %s60, %s61
      %p75 = scmp.eq.s32.totalorder %s27, 3
      %p76 = por %p74, %p75
      %p78 = scmp.ne.s32.totalorder %s61, %s77
      %p79 = scmp.eq.s32.totalorder %s27, 0
      %p80 = por %p78, %p79
      %s82 = sadd.s32 %s81, 1
      %p85 = scmp.eq.s32.totalorder %s21, 3
      %p86 = scmp.ne.s32.totalorder %s81, %s83
      %p87 = scmp.eq.s32.totalorder %s21, 0
      %p88 = por %p86, %p87
      %p89 = scmp.ne.s32.totalorder %s81, %s83
      %p90 = scmp.eq.s32.totalorder %s26, 3
      %p91 = por %p89, %p90
      %p92 = scmp.ne.s32.totalorder %s83, %s84
      %p93 = scmp.eq.s32.totalorder %s26, 0
      %p94 = por %p92, %p93
      %p95 = scmp.ne.s32.totalorder %s83, %s84
      %p96 = scmp.eq.s32.totalorder %s27, 3
      %p97 = por %p95, %p96
      %p99 = scmp.ne.s32.totalorder %s84, %s98
      %p100 = scmp.eq.s32.totalorder %s27, 0
      %p101 = por %p99, %p100
      %s103 = sadd.s32 %s102, 1
      %p106 = scmp.eq.s32.totalorder %s21, 3
      %p107 = scmp.ne.s32.totalorder %s102, %s104
      %p108 = scmp.eq.s32.totalorder %s21, 0
      %p109 = por %p107, %p108
      %p110 = scmp.ne.s32.totalorder %s102, %s104
      %p111 = scmp.eq.s32.totalorder %s26, 3
      %p112 = por %p110, %p111
      %p113 = scmp.ne.s32.totalorder %s104, %s105
      %p114 = scmp.eq.s32.totalorder %s26, 0
      %p115 = por %p113, %p114
      %p116 = scmp.ne.s32.totalorder %s104, %s105
      %p117 = scmp.eq.s32.totalorder %s27, 3
      %p118 = por %p116, %p117
      %p120 = scmp.ne.s32.totalorder %s105, %s119
      %p121 = scmp.eq.s32.totalorder %s27, 0
      %p122 = por %p120, %p121
      %s124 = sadd.s32 %s123, 1
      %p127 = scmp.eq.s32.totalorder %s21, 3
      %p128 = scmp.ne.s32.totalorder %s123, %s125
      %p129 = scmp.eq.s32.totalorder %s21, 0
      %p130 = por %p128, %p129
      %p131 = scmp.ne.s32.totalorder %s123, %s125
      %p132 = scmp.eq.s32.totalorder %s26, 3
      %p133 = por %p131, %p132
      %p134 = scmp.ne.s32.totalorder %s125, %s126
      %p135 = scmp.eq.s32.totalorder %s26, 0
      %p136 = por %p134, %p135
      %p137 = scmp.ne.s32.totalorder %s125, %s126
      %p138 = scmp.eq.s32.totalorder %s27, 3
      %p139 = por %p137, %p138
      %p141 = scmp.ne.s32.totalorder %s126, %s140
      %p142 = scmp.eq.s32.totalorder %s27, 0
      %p143 = por %p141, %p142
      %s145 = sadd.s32 %s144, 1
      %p148 = scmp.eq.s32.totalorder %s21, 3
      %p149 = scmp.ne.s32.totalorder %s144, %s146
      %p150 = scmp.eq.s32.totalorder %s21, 0
      %p151 = por %p149, %p150
      %p152 = scmp.ne.s32.totalorder %s144, %s146
      %p153 = scmp.eq.s32.totalorder %s26, 3
      %p154 = por %p152, %p153
      %p155 = scmp.ne.s32.totalorder %s146, %s147
      %p156 = scmp.eq.s32.totalorder %s26, 0
      %p157 = por %p155, %p156
      %p158 = scmp.ne.s32.totalorder %s146, %s147
      %p159 = scmp.eq.s32.totalorder %s27, 3
      %p160 = por %p158, %p159
      %p162 = scmp.ne.s32.totalorder %s147, %s161
      %p163 = scmp.eq.s32.totalorder %s27, 0
      %p164 = por %p162, %p163
      %s165 = ssub.s32 %s21, %s28
      %p166 = scmp.eq.s32.totalorder %s165, 0
      %s168 = sadd.s32 %s167, 1
      %s169 = scalar_select %p166, %s167, %s168
      %p172 = pneg %p166
      %p173 = scmp.eq.s32.totalorder %s21, 3
      %p174 = por %p172, %p173
      %p175 = scmp.ne.s32.totalorder %s167, %s170
      %p176 = scmp.eq.s32.totalorder %s21, 0
      %p177 = por %p175, %p176
      %p178 = scmp.ne.s32.totalorder %s167, %s170
      %p179 = scmp.eq.s32.totalorder %s26, 3
      %p180 = por %p178, %p179
      %p181 = scmp.ne.s32.totalorder %s170, %s171
      %p182 = scmp.eq.s32.totalorder %s26, 0
      %p183 = por %p181, %p182
      %p184 = scmp.ne.s32.totalorder %s170, %s171
      %p185 = scmp.eq.s32.totalorder %s27, 3
      %p186 = por %p184, %p185
      %p188 = scmp.ne.s32.totalorder %s171, %s187
      %p189 = scmp.eq.s32.totalorder %s27, 0
      %p190 = por %p188, %p189
      %p191 = scmp.le.s32.totalorder 1, %s21
      %p192 = scmp.lt.s32.totalorder %s21, 5
      %p193 = pnand %p191, %p192
      %p194 = pneg %p193
      // Predicated region
      $region9: #{tpu_custom_call.1} parent=5 // pred_check
        _
      $region10: #{tpu_custom_call.1} parent=5 // pred_check_branch
        %196 = sbr.rel (%p193) target = $region12
      $region11: #{tpu_custom_call.1} parent=5 // pred_region
        %s197 = ssub.s32 %s21, 1
        // Predicated region
        $region13: #{tpu_custom_call.1} parent=11 // pred_check
          %p198 = pneg %p94
        $region14: #{tpu_custom_call.1} parent=11 // pred_check_branch
          %200 = sbr.rel (%p198) target = $region16
        $region15: #{tpu_custom_call.1} parent=11 // pred_region
          _
        $region16: #{tpu_custom_call.1} parent=11 // pred_fallthru
          _
        // Predicated region
        $region17: #{tpu_custom_call.1} parent=11 // pred_check
          %p201 = pneg %p115
        $region18: #{tpu_custom_call.1} parent=11 // pred_check_branch
          %203 = sbr.rel (%p201) target = $region20
        $region19: #{tpu_custom_call.1} parent=11 // pred_region
          _
        $region20: #{tpu_custom_call.1} parent=11 // pred_fallthru
          _
        // Predicated region
        $region21: #{tpu_custom_call.1} parent=11 // pred_check
          %p204 = pneg %p136
        $region22: #{tpu_custom_call.1} parent=11 // pred_check_branch
          %206 = sbr.rel (%p204) target = $region24
        $region23: #{tpu_custom_call.1} parent=11 // pred_region
          _
        $region24: #{tpu_custom_call.1} parent=11 // pred_fallthru
          _
        // Predicated region
        $region25: #{tpu_custom_call.1} parent=11 // pred_check
          %p207 = pneg %p157
        $region26: #{tpu_custom_call.1} parent=11 // pred_check_branch
          %209 = sbr.rel (%p207) target = $region28
        $region27: #{tpu_custom_call.1} parent=11 // pred_region
          _
        $region28: #{tpu_custom_call.1} parent=11 // pred_fallthru
          _
      $region12: #{tpu_custom_call.1} parent=5 // pred_fallthru
        _
      %p210 = scmp.lt.s32.totalorder %s21, 4
      // Predicated region
      $region29: #{tpu_custom_call.1} parent=5 // pred_check
        %p211 = pneg %p210
      $region30: #{tpu_custom_call.1} parent=5 // pred_check_branch
        %213 = sbr.rel (%p211) target = $region32
      $region31: #{tpu_custom_call.1} parent=5 // pred_region
        // Predicated region
        $region33: #{tpu_custom_call.1} parent=31 // pred_check
          %p214 = pneg %p41
        $region34: #{tpu_custom_call.1} parent=31 // pred_check_branch
          %216 = sbr.rel (%p214) target = $region36
        $region35: #{tpu_custom_call.1} parent=31 // pred_region
          %s217 = sand.u32 %s31, 1
          %s218 = scalar_lea.sflag [#allocation3], %s217
          %s219 = sand.u32 %s31, 1
          %s220 = smul.addr %s219, 16
          %s221 = scalar_lea.vmem [#allocation2], %s220
          %s223 = ssub.s32 256, 256
          %224 = vsyncadd %s218, %s223
          %s225 = smul.addr %s21, 2
          %s226 = smul.addr %s225, 128
          %s227 = scalar_lea.hbm %s0, %s226
          %s229 = sshll.u32 %s221, 4
          %s230 = int_to_ptr.vmem [resolvable:$true] %s229
          %232 = dma.hbm_to_vmem [thread:$0]  %s227, 256, %s230, %s218
        $region36: #{tpu_custom_call.1} parent=31 // pred_fallthru
          _
        // Predicated region
        $region37: #{tpu_custom_call.1} parent=31 // pred_check
          %p233 = pneg %p67
        $region38: #{tpu_custom_call.1} parent=31 // pred_check_branch
          %235 = sbr.rel (%p233) target = $region40
        $region39: #{tpu_custom_call.1} parent=31 // pred_region
          %s236 = sand.u32 %s57, 1
          %s237 = scalar_lea.sflag [#allocation6], %s236
          %s238 = sand.u32 %s57, 1
          %s239 = smul.addr %s238, 16
          %s240 = scalar_lea.vmem [#allocation5], %s239
          %s242 = ssub.s32 256, 256
          %243 = vsyncadd %s237, %s242
          %s244 = smul.addr %s21, 2
          %s245 = smul.addr %s244, 128
          %s246 = scalar_lea.hbm %s1, %s245
          %s248 = sshll.u32 %s240, 4
          %s249 = int_to_ptr.vmem [resolvable:$true] %s248
          %251 = dma.hbm_to_vmem [thread:$0]  %s246, 256, %s249, %s237
        $region40: #{tpu_custom_call.1} parent=31 // pred_fallthru
          _
      $region32: #{tpu_custom_call.1} parent=5 // pred_fallthru
        _
      %p252 = scmp.le.s32.totalorder 1, %s21
      %p253 = scmp.lt.s32.totalorder %s21, 5
      %p254 = pnand %p252, %p253
      %p255 = pneg %p254
      // Predicated region
      $region41: #{tpu_custom_call.1} parent=5 // pred_check
        _
      $region42: #{tpu_custom_call.1} parent=5 // pred_check_branch
        %257 = sbr.rel (%p254) target = $region44
      $region43: #{tpu_custom_call.1} parent=5 // pred_region
        %s258 = ssub.s32 %s21, 1
        %s259 = sand.u32 %s34, 1
        %s260 = scalar_lea.sflag [#allocation3], %s259
        %s261 = sand.u32 %s34, 1
        %s262 = smul.addr %s261, 16
        %s263 = scalar_lea.vmem [#allocation2], %s262
        // Predicated region
        $region45: #{tpu_custom_call.1} parent=43 // pred_check
          %p264 = pneg %p47
        $region46: #{tpu_custom_call.1} parent=43 // pred_check_branch
          %266 = sbr.rel (%p264) target = $region48
        $region47: #{tpu_custom_call.1} parent=43 // pred_region
          %267 = dma.done %s260, 256
        $region48: #{tpu_custom_call.1} parent=43 // pred_fallthru
          _
        %s268 = sand.u32 %s60, 1
        %s269 = scalar_lea.sflag [#allocation6], %s268
        %s270 = sand.u32 %s60, 1
        %s271 = smul.addr %s270, 16
        %s272 = scalar_lea.vmem [#allocation5], %s271
        // Predicated region
        $region49: #{tpu_custom_call.1} parent=43 // pred_check
          %p273 = pneg %p73
        $region50: #{tpu_custom_call.1} parent=43 // pred_check_branch
          %275 = sbr.rel (%p273) target = $region52
        $region51: #{tpu_custom_call.1} parent=43 // pred_region
          %276 = dma.done %s269, 256
        $region52: #{tpu_custom_call.1} parent=43 // pred_fallthru
          _
        %s277 = sand.u32 %s34, 1
        %s278 = scalar_lea.sflag [#allocation3], %s277
        %s279 = sand.u32 %s34, 1
        %s280 = smul.addr %s279, 16
        %s281 = scalar_lea.vmem [#allocation2], %s280
        %p282 = pneg %p47
        %p283 = pneg %p44
        %s284 = sand.u32 %s60, 1
        %s285 = scalar_lea.sflag [#allocation6], %s284
        %s286 = sand.u32 %s60, 1
        %s287 = smul.addr %s286, 16
        %s288 = scalar_lea.vmem [#allocation5], %s287
        %p289 = pneg %p73
        %p290 = pneg %p70
        %p291 = pneg %p94
        %p292 = pneg %p91
        %p293 = pneg %p115
        %p294 = pneg %p112
        %p295 = pneg %p136
        %p296 = pneg %p133
        %p297 = pneg %p157
        %p298 = pneg %p154
        %p299 = pneg %p183
        %p300 = pneg %p180
        %s301 = sand.u32 %s170, 1
        %s302 = scalar_lea.sflag [#allocation4], %s301
        %s303 = sand.u32 %s170, 1
        %s304 = smul.addr %s303, 2
        %s305 = scalar_lea.vmem [#allocation7], %s304
        %v306 = vld [vmem:[%s263] sm:$0xff]
        %v307 = vld [vmem:[%s263 + $0x8] sm:$0xff]
        %v308 = vld [vmem:[%s272] sm:$0xff]
        %v309 = vld [vmem:[%s272 + $0x8] sm:$0xff]
        %v310 = vsub.f32 %v306, %v308
        %v311 = vsub.f32 %v307, %v309
        %v312 = vld [vmem:[%s2] sm:$0x3]
        %313 = vrot.lane.b32.xlu0 %v310, 16
        %v314 = vpop.permute.xlu0 %313
        %315 = vrot.lane.b32.xlu0 %v311, 16
        %v316 = vpop.permute.xlu0 %315
        %v317 = vlaneseq
        %v318 = vand.u32 %v317, 127
        %vm319 = vcmp.lt.s32.totalorder %v318, 16
        %v320 = vsel %vm319, %v314, %v316
        %v321 = vsel %vm319, %v316, %v314
        %v323 = vlaneseq
        %v324 = vshrl.u32 %v323, 7
        %v325 = vsub.s32 0, %v324
        %v326 = vrot.slane %v312, %v325
        %v327 = vlaneseq
        %v328 = vshrl.u32 %v327, 7
        %v329 = vsub.s32 1, %v328
        %v330 = vrot.slane %v312, %v329
        %v333 = vmul.f32 %v326, %v321
        %v334 = vmul.f32 %v330, %v320
        %v335 = vld [vmem:[%s3] sm:$0x3]
        %336 = vrot.lane.b32.xlu0 %v310, 112
        %v337 = vpop.permute.xlu0 %336
        %338 = vrot.lane.b32.xlu0 %v311, 112
        %v339 = vpop.permute.xlu0 %338
        %vm340 = vcmp.lt.s32.totalorder %v318, 112
        %v341 = vsel %vm340, %v337, %v339
        %v342 = vsel %vm340, %v339, %v337
        %v344 = vlaneseq
        %v345 = vshrl.u32 %v344, 7
        %v346 = vsub.s32 0, %v345
        %v347 = vrot.slane %v335, %v346
        %v348 = vlaneseq
        %v349 = vshrl.u32 %v348, 7
        %v350 = vsub.s32 1, %v349
        %v351 = vrot.slane %v335, %v350
        %v354 = vmul.f32 %v347, %v341
        %v355 = vmul.f32 %v351, %v342
        %v356 = vld [vmem:[%s4] sm:$0x3]
        %357 = vrot.lane.b32.xlu0 %v310, 1
        %v358 = vpop.permute.xlu0 %357
        %359 = vrot.lane.b32.xlu0 %v311, 1
        %v360 = vpop.permute.xlu0 %359
        %vm361 = vcmp.lt.s32.totalorder %v318, 1
        %v362 = vsel %vm361, %v358, %v360
        %v363 = vsel %vm361, %v360, %v358
        %v365 = vlaneseq
        %v366 = vshrl.u32 %v365, 7
        %v367 = vsub.s32 0, %v366
        %v368 = vrot.slane %v356, %v367
        %v369 = vlaneseq
        %v370 = vshrl.u32 %v369, 7
        %v371 = vsub.s32 1, %v370
        %v372 = vrot.slane %v356, %v371
        %v375 = vmul.f32 %v368, %v363
        %v376 = vmul.f32 %v372, %v362
        %v377 = vld [vmem:[%s5] sm:$0x3]
        %378 = vrot.lane.b32.xlu0 %v310, 127
        %v379 = vpop.permute.xlu0 %378
        %380 = vrot.lane.b32.xlu0 %v311, 127
        %v381 = vpop.permute.xlu0 %380
        %vm382 = vcmp.lt.s32.totalorder %v318, 127
        %v383 = vsel %vm382, %v379, %v381
        %v384 = vsel %vm382, %v381, %v379
        %v386 = vlaneseq
        %v387 = vshrl.u32 %v386, 7
        %v388 = vsub.s32 0, %v387
        %v389 = vrot.slane %v377, %v388
        %v390 = vlaneseq
        %v391 = vshrl.u32 %v390, 7
        %v392 = vsub.s32 1, %v391
        %v393 = vrot.slane %v377, %v392
        %v396 = vmul.f32 %v389, %v383
        %v397 = vmul.f32 %v393, %v384
        %v398 = vmul.f32 %v310, 4.0
        %v399 = vmul.f32 %v311, 4.0
        %v400 = vsub.f32 %v398, %v333
        %v401 = vsub.f32 %v399, %v334
        %v402 = vsub.f32 %v400, %v354
        %v403 = vsub.f32 %v401, %v355
        %v404 = vsub.f32 %v402, %v375
        %v405 = vsub.f32 %v403, %v376
        %v406 = vsub.f32 %v404, %v396
        %v407 = vsub.f32 %v405, %v397
        %v408 = vmul.f32 %v406, %v406
        %v409 = vmul.f32 %v407, %v407
        %v410 = vrot.slane %v408, 4
        %v411 = vadd.f32 %v408, %v410
        %v412 = vrot.slane %v411, 2
        %v413 = vadd.f32 %v411, %v412
        %v414 = vrot.slane %v413, 1
        %v415 = vadd.f32 %v413, %v414
        %v416 = vrot.slane %v409, 4
        %v417 = vadd.f32 %v409, %v416
        %v418 = vrot.slane %v417, 2
        %v419 = vadd.f32 %v417, %v418
        %v420 = vrot.slane %v419, 1
        %v421 = vadd.f32 %v419, %v420
        %v424 = vcombine.low %v415, %v421
        %v426 = vunpack.c.l.s4 1966171168
        %v427 = vunpack.c.0.s8 %v426
        %v428 = vlaneseq
        %v429 = vshrl.u32 %v428, 7
        %v430 = vsub.s32 %v427, %v429
        %v431 = vrot.slane %v424, %v430
        %v433 = vunpack.c.l.s4 1966171168
        %v434 = vunpack.c.0.s8 %v433
        %v435 = vlaneseq
        %v436 = vshrl.u32 %v435, 7
        %v437 = vsub.s32 %v434, %v436
        %v438 = vrot.slane %v431, %v437
        %v440 = vlaneseq
        %vm441 = vcmp.ge.s32.totalorder %v440, 0
        %vm442 = vcmp.lt.s32.totalorder %v440, 256
        %vm443 = vmand %vm441, %vm442
        %444 = vst.msk [vmem:[%s305] sm:$0x3] %vm443, %v438
        %s445 = sand.u32 %s170, 1
        %s446 = scalar_lea.sflag [#allocation4], %s445
        %s447 = sand.u32 %s170, 1
        %s448 = smul.addr %s447, 2
        %s449 = scalar_lea.vmem [#allocation7], %s448
        // Predicated region
        $region53: #{tpu_custom_call.1} parent=43 // pred_check
          %p450 = pneg %p180
        $region54: #{tpu_custom_call.1} parent=43 // pred_check_branch
          %452 = sbr.rel (%p450) target = $region56
        $region55: #{tpu_custom_call.1} parent=43 // pred_region
          %s454 = ssub.s32 32, 32
          %455 = vsyncadd %s446, %s454
          %s456 = smul.addr %s26, 2
          %s457 = smul.addr %s456, 16
          %s458 = scalar_lea.hbm %s6, %s457
          %s460 = sshll.u32 %s449, 4
          %s461 = int_to_ptr.vmem [resolvable:$true] %s460
          %463 = dma.vmem_to_hbm [thread:$0]  %s461, 32, %s458, %s446
        $region56: #{tpu_custom_call.1} parent=43 // pred_fallthru
          _
      $region44: #{tpu_custom_call.1} parent=5 // pred_fallthru
        _
      %p464 = scmp.le.s32.totalorder 2, %s21
      // Predicated region
      $region57: #{tpu_custom_call.1} parent=5 // pred_check
        %p465 = pneg %p464
      $region58: #{tpu_custom_call.1} parent=5 // pred_check_branch
        %467 = sbr.rel (%p465) target = $region60
      $region59: #{tpu_custom_call.1} parent=5 // pred_region
        %s468 = ssub.s32 %s21, 2
        // Predicated region
        $region61: #{tpu_custom_call.1} parent=59 // pred_check
          %p469 = pneg %p186
        $region62: #{tpu_custom_call.1} parent=59 // pred_check_branch
          %471 = sbr.rel (%p469) target = $region64
        $region63: #{tpu_custom_call.1} parent=59 // pred_region
          %s472 = sand.u32 %s171, 1
          %s473 = scalar_lea.sflag [#allocation4], %s472
          %s474 = sand.u32 %s171, 1
          %s475 = smul.addr %s474, 2
          %s476 = scalar_lea.vmem [#allocation7], %s475
          %477 = dma.done %s473, 32
        $region64: #{tpu_custom_call.1} parent=59 // pred_fallthru
          _
      $region60: #{tpu_custom_call.1} parent=5 // pred_fallthru
        _
    $region6: #{tpu_custom_call.1} parent=1 // loop_footer
      %s25 = sadd.s32 1, %s21
    $region7: #{tpu_custom_call.1} parent=1 // loop_footer_branch
      %20 = sbr.rel target = $region3
    $region8: #{tpu_custom_call.1} parent=1 // loop_exit
      _
    %478 = vsyncpa [#allocation3], 1
    %s479 = scalar_lea.sflag [#allocation3], 1
    %480 = vsyncpa %s479, 1
    %481 = vsyncpa [#allocation6], 1
    %s482 = scalar_lea.sflag [#allocation6], 1
    %483 = vsyncpa %s482, 1
    %484 = vsyncpa [#allocation4], 1
    %s485 = scalar_lea.sflag [#allocation4], 1
    %486 = vsyncpa %s485, 1

</llo_original>
